<compile_context>
chip_gen: v7x
topology: tpu7x:2x2x1
jax: 0.10.0
libtpu: 0.0.40
codegen_flags: <defaults>
</compile_context>

<pallas_src>
import math

import jax
import jax.numpy as jnp
from jax.experimental import pallas as pl
from jax.experimental.pallas import tpu as pltpu


def _pe_add_kernel(x_ref, pe_ref, o_ref):
    # x_ref/o_ref: (bm, bc) tile of the flattened (B*N, T*D) array.
    # pe_ref: (1, bc) f32 slice of the PE table, broadcast over rows.
    o_ref[...] = (x_ref[...].astype(jnp.float32) + pe_ref[...]).astype(o_ref.dtype)


# ---------------- PE table cache (once per (T, D); tiny vs. x traffic) -------
_PE_CACHE: dict = {}


def _pe_table(T: int, D: int) -> jax.Array:
    key = (T, D)
    pe = _PE_CACHE.get(key)
    if pe is None:
        two_i = jnp.arange(0, D, 2, dtype=jnp.float32)
        div_term = jnp.exp(two_i * (-math.log(10000.0) / D))        # (D/2,)
        position = jnp.arange(T, dtype=jnp.float32)[:, None]        # (T, 1)
        angles = position * div_term                                # (T, D/2)
        # Interleave: even cols = sin, odd cols = cos.
        pe = jnp.stack([jnp.sin(angles), jnp.cos(angles)], axis=-1).reshape(1, T * D)
        _PE_CACHE[key] = pe
    return pe


def _tpu_generation_hints():
    """Return (target_block_bytes, vmem_limit_cap) sized for this TPU gen."""
    vmem_phys = 64 << 20
    try:
        vmem_phys = int(pltpu.get_tpu_info().vmem_capacity_bytes)
    except Exception:
        pass
    kind = ""
    try:
        kind = jax.devices()[0].device_kind.lower()
    except Exception:
        pass
    if vmem_phys <= (80 << 20):
        # v7x-like: 64 MiB/TC VMEM, ~3.2 TB/s HBM -> bigger blocks, tight cap.
        return (8 << 20), (52 << 20)
    if "v5" in kind:
        # v5e: ~820 GB/s HBM -> 4 MiB blocks already hide per-step overhead.
        return (4 << 20), (100 << 20)
    # v6e (and other 128 MiB-VMEM parts).
    return (8 << 20), (100 << 20)


def positional_encoding_forward(x: jax.Array, max_len: int = 5000) -> jax.Array:
    """x: [B, N, T, D]. Returns x + PE[:T] broadcast over (B, N). Dropout = eval (identity)."""
    B, N, T, D = x.shape
    assert T <= max_len, "sequence length exceeds max_len of the PE table"
    assert D % 2 == 0, "d_model must be even (PyTorch module assumes this)"

    itemsize = jnp.dtype(x.dtype).itemsize
    M = B * N
    L = T * D

    pe2 = _pe_table(T, D)                              # (1, L) float32, cached
    target_block_bytes, vmem_cap = _tpu_generation_hints()

    # --- Column chunking (lane axis): lane-dense multiples of 128; caps the
    # per-row footprint so huge T*D cannot blow the VMEM budget. ---
    col_chunk_bytes = 1 << 20
    if L * itemsize > col_chunk_bytes and L >= 256:
        bc = ((col_chunk_bytes // itemsize) // 128) * 128
        bc = max(128, min(bc, L))
    else:
        bc = L

    # --- Row blocks: dtype-aware sublane packing (8 f32 / 16 bf16 / 32 i8). ---
    pack = max(8, 32 // itemsize)
    bm = max(1, target_block_bytes // max(1, bc * itemsize))
    bm = min(bm, M)
    if bm < M:
        bm = max(pack, (bm // pack) * pack)
        bm = min(bm, M)

    grid_m = pl.cdiv(M, bm)
    grid_c = pl.cdiv(L, bc)

    # --- Guarantee >= 2 grid steps so both v7x TensorCores get work. ---
    if grid_m * grid_c == 1:
        if M >= 2 * pack:
            bm = max(pack, ((M // 2) // pack) * pack)
            grid_m = pl.cdiv(M, bm)
        elif L >= 256:
            bc = max(128, ((L // 2) // 128) * 128)
            grid_c = pl.cdiv(L, bc)

    x2 = x.reshape(M, L)

    # VMEM budget: double-buffered in/out blocks + small PE slices + slack.
    block_bytes = bm * bc * itemsize
    vmem_needed = 4 * block_bytes + 2 * bc * 4 + (2 << 20)
    vmem_limit = int(min(max(vmem_needed, 32 << 20), vmem_cap))

    out2 = pl.pallas_call(
        _pe_add_kernel,
        out_shape=jax.ShapeDtypeStruct((M, L), x.dtype),
        grid_spec=pltpu.PrefetchScalarGridSpec(
            num_scalar_prefetch=0,
            grid=(grid_m, grid_c),
            in_specs=[
                pl.BlockSpec((bm, bc), lambda i, c: (i, c)),
                # PE indexed by column only; tiny block, re-used across rows.
                pl.BlockSpec((1, bc), lambda i, c: (0, c)),
            ],
            out_specs=pl.BlockSpec((bm, bc), lambda i, c: (i, c)),
        ),
        compiler_params=pltpu.CompilerParams(
            dimension_semantics=("parallel", "parallel"),
            vmem_limit_bytes=vmem_limit,
        ),
        cost_estimate=pl.CostEstimate(
            flops=M * L,
            transcendentals=0,
            bytes_accessed=2 * M * L * itemsize + grid_m * L * 4,
        ),
        # Same-shape/dtype elementwise op: alias x2 -> out2 (XLA copy-protects
        # the input automatically if the caller does not donate x).
        input_output_aliases={0: 0},
    )(x2, pe2)

    # TODO(synk): training-mode dropout (prng_seed/prng_random_bits mask +
    # 1/(1-p) scaling) omitted; forward matches nn.Dropout in eval mode.
    # TODO(synk): for non-f32 x, PyTorch type-promotes (bf16 + f32 pe -> f32
    # output); here the add is done in f32 but the output keeps x.dtype.
    return out2.reshape(B, N, T, D)


def _reference(x: jax.Array) -> jax.Array:
    """Plain-JAX reference mirroring the PyTorch module (eval mode)."""
    B, N, T, D = x.shape
    two_i = jnp.arange(0, D, 2, dtype=jnp.float32)
    div_term = jnp.exp(two_i * (-math.log(10000.0) / D))
    position = jnp.arange(T, dtype=jnp.float32)[:, None]
    pe = jnp.zeros((T, D), jnp.float32)
    pe = pe.at[:, 0::2].set(jnp.sin(position * div_term))
    pe = pe.at[:, 1::2].set(jnp.cos(position * div_term))
    return x + pe[None, None].astype(x.dtype)


if __name__ == "__main__":
    key = jax.random.PRNGKey(0)
    B, N, T, D = 2, 4, 16, 32
    x = jax.random.normal(key, (B, N, T, D), dtype=jnp.float32)

    # Compute the reference first (the kernel may alias x's reshaped buffer).
    ref = jax.block_until_ready(_reference(x))

    out = positional_encoding_forward(x)
    out = jax.block_until_ready(out)

    assert out.shape == (B, N, T, D)
    assert jnp.allclose(out, ref, atol=1e-5, rtol=1e-5), "mismatch vs reference"

    print("KERNEL_OK")
</pallas_src>

<mosaic_0001>
module attributes {stable_mosaic.version = 11 : i64} {
  func.func @_pe_add_kernel(%arg0: i32, %arg1: i32, %arg2: memref<8x256xf32, #tpu.memory_space<vmem>>, %arg3: memref<1x256xf32, #tpu.memory_space<vmem>>, %arg4: memref<8x256xf32, #tpu.memory_space<vmem>>) attributes {dimension_semantics = [#tpu.dimension_semantics<parallel>, #tpu.dimension_semantics<parallel>], iteration_bounds = array<i64: 1, 2>, scalar_prefetch = 0 : i64, scratch_operands = 0 : i64, tpu.core_type = #tpu.core_type<tc>, window_params = [{transform_indices = @transform_0, window_bounds = array<i64: 8, 256>}, {transform_indices = @transform_1, window_bounds = array<i64: 1, 256>}, {transform_indices = @transform_2, window_bounds = array<i64: 8, 256>}]} {
    %c0 = arith.constant 0 : index
    %c0_0 = arith.constant 0 : index
    %0 = vector.load %arg2[%c0, %c0_0] : memref<8x256xf32, #tpu.memory_space<vmem>>, vector<8x256xf32>
    %c0_1 = arith.constant 0 : index
    %c0_2 = arith.constant 0 : index
    %1 = vector.load %arg3[%c0_1, %c0_2] : memref<1x256xf32, #tpu.memory_space<vmem>>, vector<1x256xf32>
    %2 = vector.broadcast %1 : vector<1x256xf32> to vector<8x256xf32>
    %3 = arith.addf %0, %2 : vector<8x256xf32>
    %c0_3 = arith.constant 0 : index
    %c0_4 = arith.constant 0 : index
    %4 = vector.load %arg4[%c0_3, %c0_4] : memref<8x256xf32, #tpu.memory_space<vmem>>, vector<8x256xf32>
    tpu.vector_store %arg4[%c0_3, %c0_4], %3 {strides = array<i32>} : memref<8x256xf32, #tpu.memory_space<vmem>>, vector<8x256xf32>,
    return
  }
  func.func @transform_0(%arg0: i32, %arg1: i32) -> (i32, i32) {
    %c0_i32 = arith.constant 0 : i32
    return %arg0, %arg1 : i32, i32
  }
  func.func @transform_1(%arg0: i32, %arg1: i32) -> (i32, i32) {
    %c0_i32 = arith.constant 0 : i32
    %c0_i32_0 = arith.constant 0 : i32
    return %c0_i32, %arg1 : i32, i32
  }
  func.func @transform_2(%arg0: i32, %arg1: i32) -> (i32, i32) {
    %c0_i32 = arith.constant 0 : i32
    return %arg0, %arg1 : i32, i32
  }
}

</mosaic_0001>

<llo_original>
// kernel: tpu_custom_call.1
$region0: #{tpu_custom_call.1}
  #allocation0 [shape = 'u32[]', space=smem, size = 0x4, offset = 0x4, fixed_abs, tag = 'smem constant byte address 0x4 - core index']
  #allocation1 [shape = 'u32[144,128]{1,0:T(1,128)}', space=vmem, size = 0x12000, scoped, tag = 'internal scratch']
  %s0 = inlined_call_operand.hbm [shape: f32[8,512], index: 0, kind: input, shape index: {}, may-alias: {0,2}]
  %s1 = inlined_call_operand.vmem [shape: f32[1,512], index: 1, kind: input, shape index: {}]
  %s2 = inlined_call_operand.hbm [shape: f32[8,512], index: 2, kind: output, shape index: {}, may-alias: {0,2}]
  %s3 = sld [smem:[#allocation0]]
  $region45: #{tpu_custom_call.1} parent=0
    _
  %s5 = ssub.s32 1, %s3
  %s6 = scalar_select 0, %s5, %s3
  $region1: #{tpu_custom_call.1} parent=0
    #allocation2 [shape = 'u8[16384]{0}', space=vmem, size = 0x4000, scoped, tag = 'input window, operand 0']
    #allocation3 [shape = 's32[2]{0}', space=sflag, size = 0x8, scoped, tag = 'scoped memory for tpu_custom_call.1']
    #allocation4 [shape = 's32[2]{0}', space=sflag, size = 0x8, scoped, tag = 'scoped memory for tpu_custom_call.1']
    #allocation5 [shape = 'u8[16384]{0}', space=vmem, size = 0x4000, scoped, tag = 'output window, operand 0']
    %7 = vsyncpa [#allocation3], 0
    %s8 = scalar_lea.sflag [#allocation3], 1
    %9 = vsyncpa %s8, 0
    %10 = vsyncpa [#allocation4], 0
    %s11 = scalar_lea.sflag [#allocation4], 1
    %12 = vsyncpa %s11, 0
    loop: start=0, step=1, limit=4
    $region2: #{tpu_custom_call.1} parent=1 // loop_pre_header
      _
    $region3: #{tpu_custom_call.1} parent=1 // loop_header
      %s14 = sphi 0, %s18
      %p15 = scmp.ge.s32.totalorder %s14, 4
      %s21 = sphi 0, %s33
      %s22 = sphi 0, %s29
      %s23 = sphi 0, %s21
      %s24 = sphi 0, %s22
      %s25 = sphi 0, %s23
      %s26 = sphi 0, %s24
      %s38 = sphi 0, %s40
      %s41 = sphi 0, %s38
      %s42 = sphi 0, %s41
      %s58 = sphi 0, %s42
      %s64 = sphi 0, %s66
      %s67 = sphi 0, %s64
      %s68 = sphi 0, %s67
      %s84 = sphi 0, %s68
      %s92 = sphi 0, %s94
      %s95 = sphi 0, %s92
      %s96 = sphi 0, %s95
      %s112 = sphi 0, %s96
    $region4: #{tpu_custom_call.1} parent=1 // loop_header_branch
      %17 = sbr.rel (%p15) target = $region8
    $region5: #{tpu_custom_call.1} parent=1 // loop_body
      %s19 = ssub.s32 %s14, 1
      %s20 = ssub.s32 %s14, 2
      %s27 = sadd.s32 1, %s22
      %p28 = scmp.ge.s32.totalorder %s27, 2
      %s29 = scalar_select %p28, 0, %s27
      %s30 = sadd.s32 1, %s21
      %s31 = scalar_select %p28, %s30, %s21
      %p32 = scmp.ge.s32.totalorder %s31, 1
      %s33 = scalar_select %p32, 0, %s31
      %s34 = ssub.s32 %s21, %s33
      %s35 = ssub.s32 %s22, %s29
      %s36 = sor.u32 %s34, %s35
      %p37 = scmp.eq.s32.totalorder %s36, 0
      %s39 = sadd.s32 %s38, 1
      %s40 = scalar_select %p37, %s38, %s39
      %p43 = pneg %p37
      %p44 = scmp.eq.s32.totalorder %s14, 1
      %p45 = por %p43, %p44
      %p46 = scmp.ne.s32.totalorder %s38, %s41
      %p47 = scmp.eq.s32.totalorder %s14, 0
      %p48 = por %p46, %p47
      %p49 = scmp.ne.s32.totalorder %s38, %s41
      %p50 = scmp.eq.s32.totalorder %s19, 1
      %p51 = por %p49, %p50
      %p52 = scmp.ne.s32.totalorder %s41, %s42
      %p53 = scmp.eq.s32.totalorder %s19, 0
      %p54 = por %p52, %p53
      %p55 = scmp.ne.s32.totalorder %s41, %s42
      %p56 = scmp.eq.s32.totalorder %s20, 1
      %p57 = por %p55, %p56
      %p59 = scmp.ne.s32.totalorder %s42, %s58
      %p60 = scmp.eq.s32.totalorder %s20, 0
      %p61 = por %p59, %p60
      %s62 = ssub.s32 %s22, %s29
      %p63 = scmp.eq.s32.totalorder %s62, 0
      %s65 = sadd.s32 %s64, 1
      %s66 = scalar_select %p63, %s64, %s65
      %p69 = pneg %p63
      %p70 = scmp.eq.s32.totalorder %s14, 1
      %p71 = por %p69, %p70
      %p72 = scmp.ne.s32.totalorder %s64, %s67
      %p73 = scmp.eq.s32.totalorder %s14, 0
      %p74 = por %p72, %p73
      %p75 = scmp.ne.s32.totalorder %s64, %s67
      %p76 = scmp.eq.s32.totalorder %s19, 1
      %p77 = por %p75, %p76
      %p78 = scmp.ne.s32.totalorder %s67, %s68
      %p79 = scmp.eq.s32.totalorder %s19, 0
      %p80 = por %p78, %p79
      %p81 = scmp.ne.s32.totalorder %s67, %s68
      %p82 = scmp.eq.s32.totalorder %s20, 1
      %p83 = por %p81, %p82
      %p85 = scmp.ne.s32.totalorder %s68, %s84
      %p86 = scmp.eq.s32.totalorder %s20, 0
      %p87 = por %p85, %p86
      %s88 = ssub.s32 %s21, %s33
      %s89 = ssub.s32 %s22, %s29
      %s90 = sor.u32 %s88, %s89
      %p91 = scmp.eq.s32.totalorder %s90, 0
      %s93 = sadd.s32 %s92, 1
      %s94 = scalar_select %p91, %s92, %s93
      %p97 = pneg %p91
      %p98 = scmp.eq.s32.totalorder %s14, 1
      %p99 = por %p97, %p98
      %p100 = scmp.ne.s32.totalorder %s92, %s95
      %p101 = scmp.eq.s32.totalorder %s14, 0
      %p102 = por %p100, %p101
      %p103 = scmp.ne.s32.totalorder %s92, %s95
      %p104 = scmp.eq.s32.totalorder %s19, 1
      %p105 = por %p103, %p104
      %p106 = scmp.ne.s32.totalorder %s95, %s96
      %p107 = scmp.eq.s32.totalorder %s19, 0
      %p108 = por %p106, %p107
      %p109 = scmp.ne.s32.totalorder %s95, %s96
      %p110 = scmp.eq.s32.totalorder %s20, 1
      %p111 = por %p109, %p110
      %p113 = scmp.ne.s32.totalorder %s96, %s112
      %p114 = scmp.eq.s32.totalorder %s20, 0
      %p115 = por %p113, %p114
      %p116 = scmp.le.s32.totalorder 1, %s14
      %p117 = scmp.lt.s32.totalorder %s14, 3
      %p118 = pnand %p116, %p117
      %p119 = pneg %p118
      // Predicated region
      $region9: #{tpu_custom_call.1} parent=5 // pred_check
        _
      $region10: #{tpu_custom_call.1} parent=5 // pred_check_branch
        %121 = sbr.rel (%p118) target = $region12
      $region11: #{tpu_custom_call.1} parent=5 // pred_region
        %s122 = ssub.s32 %s14, 1
      $region12: #{tpu_custom_call.1} parent=5 // pred_fallthru
        _
      %p123 = scmp.lt.s32.totalorder %s14, 2
      // Predicated region
      $region13: #{tpu_custom_call.1} parent=5 // pred_check
        %p124 = pneg %p123
      $region14: #{tpu_custom_call.1} parent=5 // pred_check_branch
        %126 = sbr.rel (%p124) target = $region16
      $region15: #{tpu_custom_call.1} parent=5 // pred_region
        // Predicated region
        $region17: #{tpu_custom_call.1} parent=15 // pred_check
          %p127 = pneg %p48
        $region18: #{tpu_custom_call.1} parent=15 // pred_check_branch
          %129 = sbr.rel (%p127) target = $region20
        $region19: #{tpu_custom_call.1} parent=15 // pred_region
          %s130 = sand.u32 %s38, 1
          %s131 = scalar_lea.sflag [#allocation3], %s130
          %s132 = sand.u32 %s38, 1
          %s133 = smul.addr %s132, 16
          %s134 = scalar_lea.vmem [#allocation2], %s133
          %s135 = smul.u32 2, %s22
          %s137 = ssub.s32 256, 256
          %138 = vsyncadd %s131, %s137
          %s139 = smul.addr %s21, 4
          %s140 = sadd.s32 %s135, %s139
          %s141 = smul.addr %s140, 128
          %s142 = scalar_lea.hbm %s0, %s141
          %s144 = sshll.u32 %s134, 4
          %s145 = int_to_ptr.vmem [resolvable:$true] %s144
          %147 = dma.hbm_to_vmem [thread:$0]  %s142, 256, %s145, %s131
        $region20: #{tpu_custom_call.1} parent=15 // pred_fallthru
          _
        // Predicated region
        $region21: #{tpu_custom_call.1} parent=15 // pred_check
          %p148 = pneg %p74
        $region22: #{tpu_custom_call.1} parent=15 // pred_check_branch
          %150 = sbr.rel (%p148) target = $region24
        $region23: #{tpu_custom_call.1} parent=15 // pred_region
          %s151 = smul.u32 2, %s22
          %p152 = scmp.lt.s32.totalorder %s151, 3
          %s153 = scalar_select %p152, %s151, 3
          %s154 = scalar_lea.vmem %s1, %s153
          %s155 = smul.u32 2, %s22
        $region24: #{tpu_custom_call.1} parent=15 // pred_fallthru
          _
      $region16: #{tpu_custom_call.1} parent=5 // pred_fallthru
        _
      %p156 = scmp.le.s32.totalorder 1, %s14
      %p157 = scmp.lt.s32.totalorder %s14, 3
      %p158 = pnand %p156, %p157
      %p159 = pneg %p158
      // Predicated region
      $region25: #{tpu_custom_call.1} parent=5 // pred_check
        _
      $region26: #{tpu_custom_call.1} parent=5 // pred_check_branch
        %161 = sbr.rel (%p158) target = $region28
      $region27: #{tpu_custom_call.1} parent=5 // pred_region
        %s162 = ssub.s32 %s14, 1
        %s163 = sand.u32 %s41, 1
        %s164 = scalar_lea.sflag [#allocation3], %s163
        %s165 = sand.u32 %s41, 1
        %s166 = smul.addr %s165, 16
        %s167 = scalar_lea.vmem [#allocation2], %s166
        // Predicated region
        $region29: #{tpu_custom_call.1} parent=27 // pred_check
          %p168 = pneg %p54
        $region30: #{tpu_custom_call.1} parent=27 // pred_check_branch
          %170 = sbr.rel (%p168) target = $region32
        $region31: #{tpu_custom_call.1} parent=27 // pred_region
          %171 = dma.done %s164, 256
        $region32: #{tpu_custom_call.1} parent=27 // pred_fallthru
          _
        %s172 = sand.u32 %s41, 1
        %s173 = scalar_lea.sflag [#allocation3], %s172
        %s174 = sand.u32 %s41, 1
        %s175 = smul.addr %s174, 16
        %s176 = scalar_lea.vmem [#allocation2], %s175
        %p177 = pneg %p54
        %p178 = pneg %p51
        %s179 = smul.u32 2, %s24
        %p180 = scmp.lt.s32.totalorder %s179, 3
        %s181 = scalar_select %p180, %s179, 3
        %s182 = scalar_lea.vmem %s1, %s181
        %p183 = pneg %p80
        %p184 = pneg %p77
        %p185 = pneg %p108
        %p186 = pneg %p105
        %s187 = sand.u32 %s95, 1
        %s188 = scalar_lea.sflag [#allocation4], %s187
        %s189 = sand.u32 %s95, 1
        %s190 = smul.addr %s189, 16
        %s191 = scalar_lea.vmem [#allocation5], %s190
        %s192 = smul.u32 2, %s24
        %s193 = smul.u32 2, %s24
        %p194 = scmp.lt.s32.totalorder %s193, 3
        %s195 = scalar_select %p194, %s193, 3
        %s196 = scalar_lea.vmem %s1, %s195
        %s197 = smul.u32 2, %s24
        %s198 = smul.u32 2, %s24
        %v199 = vld [vmem:[%s167] sm:$0xff]
        %v200 = vld [vmem:[%s167 + $0x8] sm:$0xff]
        %v201 = vld [vmem:[%s196] sm:$0x3]
        %v203 = vlaneseq
        %v204 = vshrl.u32 %v203, 7
        %v205 = vsub.s32 0, %v204
        %v206 = vrot.slane %v201, %v205
        %v207 = vlaneseq
        %v208 = vshrl.u32 %v207, 7
        %v209 = vsub.s32 1, %v208
        %v210 = vrot.slane %v201, %v209
        %v213 = vadd.f32 %v199, %v206
        %v214 = vadd.f32 %v200, %v210
        %215 = vst [vmem:[%s191] sm:$0xff] %v213
        %216 = vst [vmem:[%s191 + $0x8] sm:$0xff] %v214
        %s217 = sand.u32 %s95, 1
        %s218 = scalar_lea.sflag [#allocation4], %s217
        %s219 = sand.u32 %s95, 1
        %s220 = smul.addr %s219, 16
        %s221 = scalar_lea.vmem [#allocation5], %s220
        // Predicated region
        $region33: #{tpu_custom_call.1} parent=27 // pred_check
          %p222 = pneg %p105
        $region34: #{tpu_custom_call.1} parent=27 // pred_check_branch
          %224 = sbr.rel (%p222) target = $region36
        $region35: #{tpu_custom_call.1} parent=27 // pred_region
          %s225 = smul.u32 2, %s24
          %s227 = ssub.s32 256, 256
          %228 = vsyncadd %s218, %s227
          %s229 = smul.addr %s23, 4
          %s230 = sadd.s32 %s225, %s229
          %s231 = smul.addr %s230, 128
          %s232 = scalar_lea.hbm %s2, %s231
          %s234 = sshll.u32 %s221, 4
          %s235 = int_to_ptr.vmem [resolvable:$true] %s234
          %237 = dma.vmem_to_hbm [thread:$0]  %s235, 256, %s232, %s218
        $region36: #{tpu_custom_call.1} parent=27 // pred_fallthru
          _
      $region28: #{tpu_custom_call.1} parent=5 // pred_fallthru
        _
      %p238 = scmp.le.s32.totalorder 2, %s14
      // Predicated region
      $region37: #{tpu_custom_call.1} parent=5 // pred_check
        %p239 = pneg %p238
      $region38: #{tpu_custom_call.1} parent=5 // pred_check_branch
        %241 = sbr.rel (%p239) target = $region40
      $region39: #{tpu_custom_call.1} parent=5 // pred_region
        %s242 = ssub.s32 %s14, 2
        // Predicated region
        $region41: #{tpu_custom_call.1} parent=39 // pred_check
          %p243 = pneg %p111
        $region42: #{tpu_custom_call.1} parent=39 // pred_check_branch
          %245 = sbr.rel (%p243) target = $region44
        $region43: #{tpu_custom_call.1} parent=39 // pred_region
          %s246 = sand.u32 %s96, 1
          %s247 = scalar_lea.sflag [#allocation4], %s246
          %s248 = sand.u32 %s96, 1
          %s249 = smul.addr %s248, 16
          %s250 = scalar_lea.vmem [#allocation5], %s249
          %251 = dma.done %s247, 256
        $region44: #{tpu_custom_call.1} parent=39 // pred_fallthru
          _
      $region40: #{tpu_custom_call.1} parent=5 // pred_fallthru
        _
    $region6: #{tpu_custom_call.1} parent=1 // loop_footer
      %s18 = sadd.s32 1, %s14
    $region7: #{tpu_custom_call.1} parent=1 // loop_footer_branch
      %13 = sbr.rel target = $region3
    $region8: #{tpu_custom_call.1} parent=1 // loop_exit
      _
    %252 = vsyncpa [#allocation3], 1
    %s253 = scalar_lea.sflag [#allocation3], 1
    %254 = vsyncpa %s253, 1
    %255 = vsyncpa [#allocation4], 1
    %s256 = scalar_lea.sflag [#allocation4], 1
    %257 = vsyncpa %s256, 1

</llo_original>
